<compile_context>
chip_gen: v7x
topology: tpu7x:2x2x1
jax: 0.10.0
libtpu: 0.0.40
codegen_flags: <defaults>
</compile_context>

<pallas_src>
import functools

import jax
import jax.numpy as jnp
from jax.experimental import pallas as pl
from jax.experimental.pallas import tpu as pltpu


def _round_up(n, m):
    return ((n + m - 1) // m) * m


def _cdiv(a, b):
    return (a + b - 1) // b


def _mlp_seq_kernel(num_layers, final_relu_layer, *refs):
    """Fused MLP kernel: all layers of the sequential net in one VMEM pass.

    refs = (x_ref, w0_ref, b0_ref, w1_ref, b1_ref, ..., o_ref)
    x tile: (block_batch, d_in); w_i: (inner[i], inner[i+1]) in MXU dtype;
    b_i: (1, inner[i+1]) in f32; o tile: (block_batch, d_out).
    """
    x_ref = refs[0]
    o_ref = refs[-1]

    h = x_ref[...]
    for i in range(num_layers):
        w_ref = refs[1 + 2 * i]
        b_ref = refs[2 + 2 * i]
        if i < final_relu_layer:
            # ReLU precedes the Linear (matches nn.Sequential order).  For
            # i > 0 this runs on the f32 accumulator (single f32 VPU pass).
            h = jnp.maximum(h, 0.0)
        # Single repack per layer: cast the matmul operand to the weight dtype
        # (bf16 weights -> bf16 MXU path; f32 weights -> no-op cast).
        acc = jnp.dot(h.astype(w_ref.dtype), w_ref[...],
                      preferred_element_type=jnp.float32)
        h = acc + b_ref[...]                 # bias is stored f32: no per-step cast
    o_ref[...] = h.astype(o_ref.dtype)


def prepare_mlp_params(weights, biases, param_dtype=None):
    """One-time parameter prep (hoisted out of the per-call hot path).

    Transposes PyTorch-convention weights (out, in) -> (in, out); pads only
    the *interior* hidden feature dims to a multiple of 128 lanes (input and
    output feature dims stay at their true widths).  Biases become f32
    (1, width) rows.  `param_dtype` should match the activation/MXU dtype
    (e.g. bf16 for a bf16 model); None keeps the original weight dtype.

    Returns (wts, bss, dims, inner_dims).
    """
    num_layers = len(weights)
    d_in = int(weights[0].shape[1])
    dims = [d_in] + [int(w.shape[0]) for w in weights]

    inner = list(dims)
    for i in range(1, len(dims) - 1):          # pad hidden dims only
        inner[i] = _round_up(dims[i], 128)

    wts, bss = [], []
    for i in range(num_layers):
        w = jnp.asarray(weights[i])
        if param_dtype is not None:
            w = w.astype(param_dtype)
        b = jnp.asarray(biases[i]).astype(jnp.float32)   # biases stay f32

        in_p, out_p = inner[i], inner[i + 1]
        wt = w.T                                          # (in, out)
        if wt.shape != (in_p, out_p):
            wp = jnp.zeros((in_p, out_p), wt.dtype)
            wp = wp.at[: wt.shape[0], : wt.shape[1]].set(wt)
        else:
            wp = wt
        bp = jnp.zeros((1, out_p), jnp.float32).at[0, : b.shape[0]].set(b)
        wts.append(wp)
        bss.append(bp)
    return wts, bss, dims, inner


def mlp_seq_apply(x, wts, bss, dims, inner, *, final_relu=False, block_batch=None):
    """Run the fused MLPSeq forward with pre-prepared parameters."""
    num_layers = len(wts)
    final_relu_layer = num_layers if final_relu else num_layers - 1

    lead_shape = None
    if x.ndim != 2:                      # nn.Linear accepts ND; flatten leading dims
        lead_shape = x.shape[:-1]
        x = x.reshape((-1, x.shape[-1]))

    B, d_in = x.shape
    assert d_in == dims[0], "input feature dim mismatch"
    d_out = dims[-1]
    out_dtype = x.dtype
    x_itemsize = jnp.dtype(x.dtype).itemsize
    out_itemsize = jnp.dtype(out_dtype).itemsize
    row_align = max(8, 32 // x_itemsize)     # 8 rows for f32, 16 for bf16

    if block_batch is None:
        # Step-overhead bound kernel: use the fewest, biggest tiles possible,
        # but keep the step count >= 2 and even so v7x's two TensorCores both
        # get work (no-op on single-TC v5e/v6e).  2048 rows at these widths is
        # well under 1 MiB per buffer.
        max_block = 2048
        if B <= row_align:
            block_batch = row_align
        else:
            num_steps = max(2, 2 * _cdiv(B, 2 * max_block))
            block_batch = _round_up(_cdiv(B, num_steps), row_align)
    block_batch = max(row_align, _round_up(block_batch, row_align))

    # Ragged last block is fine: rows are independent and Pallas masks the
    # out-of-bounds portion of the read/write, so no HBM batch padding needed.
    grid = (_cdiv(B, block_batch),)

    in_specs = [pl.BlockSpec((block_batch, d_in), lambda i: (i, 0))]
    operands = [x]
    for w, b in zip(wts, bss):
        # Grid-invariant parameters: whole array resident in VMEM (no per-step
        # pipelining / double buffering).
        # TODO(synk): for very large hidden dims (e.g. 2048) on v7x, store the
        # weights in bf16 or pipeline them instead of full VMEM residency.
        in_specs.append(pl.BlockSpec(memory_space=pltpu.MemorySpace.VMEM))
        in_specs.append(pl.BlockSpec(memory_space=pltpu.MemorySpace.VMEM))
        operands.append(w)
        operands.append(b)

    # Output emitted at the true width (B, d_out): masked lane stores, but 8x
    # fewer HBM bytes than a 128-lane pad and no post-kernel XLA slice pass.
    out_specs = pl.BlockSpec((block_batch, d_out), lambda i: (i, 0))

    # VMEM footprint: double-buffered in/out tiles + resident params + f32
    # activation working set.  2x margin, capped at 48 MiB (v7x headroom).
    param_bytes = sum(int(a.size) * a.dtype.itemsize for a in wts + bss)
    tile_bytes = 2 * block_batch * (d_in * x_itemsize + d_out * out_itemsize)
    act_bytes = 2 * block_batch * max(inner) * 4
    footprint = param_bytes + tile_bytes + act_bytes
    vmem_limit = int(min(48 * 2**20, max(16 * 2**20, 2 * footprint)))

    # Cost hint so XLA can overlap this small custom call with its neighbours.
    flops = 2 * B * sum(inner[i] * inner[i + 1] for i in range(num_layers))
    bytes_accessed = (B * d_in * x_itemsize + B * d_out * out_itemsize + param_bytes)
    cost = pl.CostEstimate(flops=flops, transcendentals=0,
                           bytes_accessed=bytes_accessed)

    kernel = functools.partial(_mlp_seq_kernel, num_layers, final_relu_layer)

    out = pl.pallas_call(
        kernel,
        grid=grid,
        in_specs=in_specs,
        out_specs=out_specs,
        out_shape=jax.ShapeDtypeStruct((B, d_out), out_dtype),
        compiler_params=pltpu.CompilerParams(
            dimension_semantics=("parallel",),
            vmem_limit_bytes=vmem_limit,
        ),
        cost_estimate=cost,
    )(*operands)

    if lead_shape is not None:
        out = out.reshape(lead_shape + (d_out,))
    return out


def mlp_seq_forward(x, weights, biases, final_relu=False, block_batch=None):
    """Convenience wrapper: prepare params (ideally done once) + apply."""
    wts, bss, dims, inner = prepare_mlp_params(weights, biases)
    return mlp_seq_apply(x, wts, bss, dims, inner,
                         final_relu=final_relu, block_batch=block_batch)


def mlp_seq_reference(x, weights, biases, final_relu=False):
    """Pure-JAX reference mirroring the PyTorch Sequential exactly."""
    num_layers = len(weights)
    final_relu_layer = num_layers if final_relu else num_layers - 1
    h = x.astype(jnp.float32)
    for i in range(num_layers):
        if i < final_relu_layer:
            h = jnp.maximum(h, 0.0)
        h = h @ jnp.asarray(weights[i]).T.astype(jnp.float32) + \
            jnp.asarray(biases[i]).astype(jnp.float32)
    return h.astype(x.dtype)


if __name__ == "__main__":
    # MLPSeq(layer_sizes=[32, 64, 48, 16], final_relu=False)
    layer_sizes = [32, 64, 48, 16]
    final_relu = False
    batch = 512   # auto heuristic -> 2 grid steps of 256 rows (even, v7x-friendly)

    key = jax.random.PRNGKey(0)
    keys = jax.random.split(key, 2 * (len(layer_sizes) - 1) + 1)

    x = jax.random.normal(keys[0], (batch, layer_sizes[0]), dtype=jnp.float32)

    weights, biases = [], []
    for li in range(len(layer_sizes) - 1):
        fan_in = layer_sizes[li]
        fan_out = layer_sizes[li + 1]
        bound = 1.0 / (fan_in ** 0.5)   # matches nn.Linear default init scale
        w = jax.random.uniform(keys[1 + 2 * li], (fan_out, fan_in),
                               minval=-bound, maxval=bound, dtype=jnp.float32)
        b = jax.random.uniform(keys[2 + 2 * li], (fan_out,),
                               minval=-bound, maxval=bound, dtype=jnp.float32)
        weights.append(w)
        biases.append(b)

    # Parameter prep (transpose + interior-dim padding) hoisted out of the
    # per-call hot path.
    wts, bss, dims, inner = prepare_mlp_params(weights, biases)

    out = mlp_seq_apply(x, wts, bss, dims, inner, final_relu=final_relu)
    out = jax.block_until_ready(out)

    ref = mlp_seq_reference(x, weights, biases, final_relu=final_relu)
    assert out.shape == (batch, layer_sizes[-1])
    assert jnp.allclose(out, ref, atol=1e-5, rtol=1e-5), "mismatch vs reference"

    print("KERNEL_OK")
</pallas_src>

<mosaic_0001>
module attributes {stable_mosaic.version = 11 : i64} {
  func.func @_mlp_seq_kernel(%arg0: i32, %arg1: memref<256x32xf32, #tpu.memory_space<vmem>>, %arg2: memref<32x128xf32, #tpu.memory_space<vmem>>, %arg3: memref<1x128xf32, #tpu.memory_space<vmem>>, %arg4: memref<128x128xf32, #tpu.memory_space<vmem>>, %arg5: memref<1x128xf32, #tpu.memory_space<vmem>>, %arg6: memref<128x16xf32, #tpu.memory_space<vmem>>, %arg7: memref<1x16xf32, #tpu.memory_space<vmem>>, %arg8: memref<256x16xf32, #tpu.memory_space<vmem>>) attributes {dimension_semantics = [#tpu.dimension_semantics<parallel>], iteration_bounds = array<i64: 2>, scalar_prefetch = 0 : i64, scratch_operands = 0 : i64, tpu.core_type = #tpu.core_type<tc>, window_params = [{transform_indices = @transform_0, window_bounds = array<i64: 256, 32>}, {pipeline_mode = #tpu.pipeline_mode<synchronous>, transform_indices = @transform_1, window_bounds = array<i64: 32, 128>}, {pipeline_mode = #tpu.pipeline_mode<synchronous>, transform_indices = @transform_2, window_bounds = array<i64: 1, 128>}, {pipeline_mode = #tpu.pipeline_mode<synchronous>, transform_indices = @transform_3, window_bounds = array<i64: 128, 128>}, {pipeline_mode = #tpu.pipeline_mode<synchronous>, transform_indices = @transform_4, window_bounds = array<i64: 1, 128>}, {pipeline_mode = #tpu.pipeline_mode<synchronous>, transform_indices = @transform_5, window_bounds = array<i64: 128, 16>}, {pipeline_mode = #tpu.pipeline_mode<synchronous>, transform_indices = @transform_6, window_bounds = array<i64: 1, 16>}, {transform_indices = @transform_7, window_bounds = array<i64: 256, 16>}]} {
    %c0 = arith.constant 0 : index
    %c0_0 = arith.constant 0 : index
    %0 = vector.load %arg1[%c0, %c0_0] : memref<256x32xf32, #tpu.memory_space<vmem>>, vector<256x32xf32>
    %cst = arith.constant 0.000000e+00 : f32
    %1 = vector.broadcast %cst : f32 to vector<256x32xf32>
    %2 = arith.maximumf %0, %1 : vector<256x32xf32>
    %c0_1 = arith.constant 0 : index
    %c0_2 = arith.constant 0 : index
    %3 = vector.load %arg2[%c0_1, %c0_2] : memref<32x128xf32, #tpu.memory_space<vmem>>, vector<32x128xf32>
    %cst_3 = arith.constant dense<0.000000e+00> : vector<256x128xf32>
    %4 = tpu.matmul %2, %3, %cst_3 {dimension_numbers = #tpu.dot_dimension_numbers<[1], [0], [0], [1], [0, 0, 1, 1], [], []>} : vector<256x32xf32>, vector<32x128xf32>, vector<256x128xf32> -> vector<256x128xf32>
    %c0_4 = arith.constant 0 : index
    %c0_5 = arith.constant 0 : index
    %5 = vector.load %arg3[%c0_4, %c0_5] : memref<1x128xf32, #tpu.memory_space<vmem>>, vector<1x128xf32>
    %6 = vector.broadcast %5 : vector<1x128xf32> to vector<256x128xf32>
    %7 = arith.addf %4, %6 : vector<256x128xf32>
    %cst_6 = arith.constant 0.000000e+00 : f32
    %8 = vector.broadcast %cst_6 : f32 to vector<256x128xf32>
    %9 = arith.maximumf %7, %8 : vector<256x128xf32>
    %c0_7 = arith.constant 0 : index
    %c0_8 = arith.constant 0 : index
    %10 = vector.load %arg4[%c0_7, %c0_8] : memref<128x128xf32, #tpu.memory_space<vmem>>, vector<128x128xf32>
    %cst_9 = arith.constant dense<0.000000e+00> : vector<256x128xf32>
    %11 = tpu.matmul %9, %10, %cst_9 {dimension_numbers = #tpu.dot_dimension_numbers<[1], [0], [0], [1], [0, 0, 1, 1], [], []>} : vector<256x128xf32>, vector<128x128xf32>, vector<256x128xf32> -> vector<256x128xf32>
    %c0_10 = arith.constant 0 : index
    %c0_11 = arith.constant 0 : index
    %12 = vector.load %arg5[%c0_10, %c0_11] : memref<1x128xf32, #tpu.memory_space<vmem>>, vector<1x128xf32>
    %13 = vector.broadcast %12 : vector<1x128xf32> to vector<256x128xf32>
    %14 = arith.addf %11, %13 : vector<256x128xf32>
    %c0_12 = arith.constant 0 : index
    %c0_13 = arith.constant 0 : index
    %15 = vector.load %arg6[%c0_12, %c0_13] : memref<128x16xf32, #tpu.memory_space<vmem>>, vector<128x16xf32>
    %cst_14 = arith.constant dense<0.000000e+00> : vector<256x16xf32>
    %16 = tpu.matmul %14, %15, %cst_14 {dimension_numbers = #tpu.dot_dimension_numbers<[1], [0], [0], [1], [0, 0, 1, 1], [], []>} : vector<256x128xf32>, vector<128x16xf32>, vector<256x16xf32> -> vector<256x16xf32>
    %c0_15 = arith.constant 0 : index
    %c0_16 = arith.constant 0 : index
    %17 = vector.load %arg7[%c0_15, %c0_16] : memref<1x16xf32, #tpu.memory_space<vmem>>, vector<1x16xf32>
    %18 = vector.broadcast %17 : vector<1x16xf32> to vector<256x16xf32>
    %19 = arith.addf %16, %18 : vector<256x16xf32>
    %c0_17 = arith.constant 0 : index
    %c0_18 = arith.constant 0 : index
    %20 = vector.load %arg8[%c0_17, %c0_18] : memref<256x16xf32, #tpu.memory_space<vmem>>, vector<256x16xf32>
    tpu.vector_store %arg8[%c0_17, %c0_18], %19 {strides = array<i32>} : memref<256x16xf32, #tpu.memory_space<vmem>>, vector<256x16xf32>,
    return
  }
  func.func @transform_0(%arg0: i32) -> (i32, i32) {
    %c0_i32 = arith.constant 0 : i32
    %c0_i32_0 = arith.constant 0 : i32
    return %arg0, %c0_i32 : i32, i32
  }
  func.func @transform_1(%arg0: i32) -> (i32, i32) {
    %c0_i32 = arith.constant 0 : i32
    %c0_i32_0 = arith.constant 0 : i32
    %c0_i32_1 = arith.constant 0 : i32
    return %c0_i32, %c0_i32_0 : i32, i32
  }
  func.func @transform_2(%arg0: i32) -> (i32, i32) {
    %c0_i32 = arith.constant 0 : i32
    %c0_i32_0 = arith.constant 0 : i32
    %c0_i32_1 = arith.constant 0 : i32
    return %c0_i32, %c0_i32_0 : i32, i32
  }
  func.func @transform_3(%arg0: i32) -> (i32, i32) {
    %c0_i32 = arith.constant 0 : i32
    %c0_i32_0 = arith.constant 0 : i32
    %c0_i32_1 = arith.constant 0 : i32
    return %c0_i32, %c0_i32_0 : i32, i32
  }
  func.func @transform_4(%arg0: i32) -> (i32, i32) {
    %c0_i32 = arith.constant 0 : i32
    %c0_i32_0 = arith.constant 0 : i32
    %c0_i32_1 = arith.constant 0 : i32
    return %c0_i32, %c0_i32_0 : i32, i32
  }
  func.func @transform_5(%arg0: i32) -> (i32, i32) {
    %c0_i32 = arith.constant 0 : i32
    %c0_i32_0 = arith.constant 0 : i32
    %c0_i32_1 = arith.constant 0 : i32
    return %c0_i32, %c0_i32_0 : i32, i32
  }
  func.func @transform_6(%arg0: i32) -> (i32, i32) {
    %c0_i32 = arith.constant 0 : i32
    %c0_i32_0 = arith.constant 0 : i32
    %c0_i32_1 = arith.constant 0 : i32
    return %c0_i32, %c0_i32_0 : i32, i32
  }
  func.func @transform_7(%arg0: i32) -> (i32, i32) {
    %c0_i32 = arith.constant 0 : i32
    %c0_i32_0 = arith.constant 0 : i32
    return %arg0, %c0_i32 : i32, i32
  }
}

</mosaic_0001>

<llo_original>
// kernel: tpu_custom_call.1
$region0: #{tpu_custom_call.1}
  #allocation0 [shape = 'u32[]', space=smem, size = 0x4, offset = 0x4, fixed_abs, tag = 'smem constant byte address 0x4 - core index']
  #allocation1 [shape = 'u32[144,128]{1,0:T(1,128)}', space=vmem, size = 0x12000, scoped, tag = 'internal scratch']
  %s0 = inlined_call_operand.vmem [shape: f32[512,32], index: 0, kind: input, shape index: {}]
  %s1 = inlined_call_operand.vmem [shape: f32[32,128], index: 1, kind: input, shape index: {}]
  %s2 = inlined_call_operand.vmem [shape: f32[1,128], index: 2, kind: input, shape index: {}]
  %s3 = inlined_call_operand.vmem [shape: f32[128,128], index: 3, kind: input, shape index: {}]
  %s4 = inlined_call_operand.vmem [shape: f32[1,128], index: 4, kind: input, shape index: {}]
  %s5 = inlined_call_operand.vmem [shape: f32[128,16], index: 5, kind: input, shape index: {}]
  %s6 = inlined_call_operand.vmem [shape: f32[1,16], index: 6, kind: input, shape index: {}]
  %s7 = inlined_call_operand.vmem [shape: f32[512,16], index: 7, kind: output, shape index: {}]
  %s8 = sld [smem:[#allocation0]]
  $region61: #{tpu_custom_call.1} parent=0
    _
  %s10 = ssub.s32 1, %s8
  %s11 = scalar_select 0, %s10, %s8
  loop: start=0, step=1, limit=4
  $region2: #{tpu_custom_call.1} parent=0 // loop_pre_header
    _
  $region3: #{tpu_custom_call.1} parent=0 // loop_header
    %s13 = sphi 0, %s17
    %p14 = scmp.ge.s32.totalorder %s13, 4
    %s23 = sphi 0, %s25
    %s26 = sphi 0, %s23
    %s27 = sphi 0, %s26
    %s43 = sphi 0, %s27
    %s47 = sphi 0, %s47
    %s49 = sphi 0, %s47
    %s50 = sphi 0, %s49
    %s64 = sphi 0, %s50
    %s68 = sphi 0, %s68
    %s70 = sphi 0, %s68
    %s71 = sphi 0, %s70
    %s85 = sphi 0, %s71
    %s89 = sphi 0, %s89
    %s91 = sphi 0, %s89
    %s92 = sphi 0, %s91
    %s106 = sphi 0, %s92
    %s110 = sphi 0, %s110
    %s112 = sphi 0, %s110
    %s113 = sphi 0, %s112
    %s127 = sphi 0, %s113
    %s131 = sphi 0, %s131
    %s133 = sphi 0, %s131
    %s134 = sphi 0, %s133
    %s148 = sphi 0, %s134
    %s152 = sphi 0, %s152
    %s154 = sphi 0, %s152
    %s155 = sphi 0, %s154
    %s169 = sphi 0, %s155
    %s175 = sphi 0, %s177
    %s178 = sphi 0, %s175
    %s179 = sphi 0, %s178
    %s195 = sphi 0, %s179
  $region4: #{tpu_custom_call.1} parent=0 // loop_header_branch
    %16 = sbr.rel (%p14) target = $region8
  $region5: #{tpu_custom_call.1} parent=0 // loop_body
    %s18 = ssub.s32 %s13, 1
    %s19 = ssub.s32 %s13, 2
    %s20 = sadd.s32 %s13, 1
    %s21 = ssub.s32 %s13, %s20
    %p22 = scmp.eq.s32.totalorder %s21, 0
    %s24 = sadd.s32 %s23, 1
    %s25 = scalar_select %p22, %s23, %s24
    %p28 = pneg %p22
    %p29 = scmp.eq.s32.totalorder %s13, 1
    %p30 = por %p28, %p29
    %p31 = scmp.ne.s32.totalorder %s23, %s26
    %p32 = scmp.eq.s32.totalorder %s13, 0
    %p33 = por %p31, %p32
    %p34 = scmp.ne.s32.totalorder %s23, %s26
    %p35 = scmp.eq.s32.totalorder %s18, 1
    %p36 = por %p34, %p35
    %p37 = scmp.ne.s32.totalorder %s26, %s27
    %p38 = scmp.eq.s32.totalorder %s18, 0
    %p39 = por %p37, %p38
    %p40 = scmp.ne.s32.totalorder %s26, %s27
    %p41 = scmp.eq.s32.totalorder %s19, 1
    %p42 = por %p40, %p41
    %p44 = scmp.ne.s32.totalorder %s27, %s43
    %p45 = scmp.eq.s32.totalorder %s19, 0
    %p46 = por %p44, %p45
    %s48 = sadd.s32 %s47, 1
    %p51 = scmp.eq.s32.totalorder %s13, 1
    %p52 = scmp.ne.s32.totalorder %s47, %s49
    %p53 = scmp.eq.s32.totalorder %s13, 0
    %p54 = por %p52, %p53
    %p55 = scmp.ne.s32.totalorder %s47, %s49
    %p56 = scmp.eq.s32.totalorder %s18, 1
    %p57 = por %p55, %p56
    %p58 = scmp.ne.s32.totalorder %s49, %s50
    %p59 = scmp.eq.s32.totalorder %s18, 0
    %p60 = por %p58, %p59
    %p61 = scmp.ne.s32.totalorder %s49, %s50
    %p62 = scmp.eq.s32.totalorder %s19, 1
    %p63 = por %p61, %p62
    %p65 = scmp.ne.s32.totalorder %s50, %s64
    %p66 = scmp.eq.s32.totalorder %s19, 0
    %p67 = por %p65, %p66
    %s69 = sadd.s32 %s68, 1
    %p72 = scmp.eq.s32.totalorder %s13, 1
    %p73 = scmp.ne.s32.totalorder %s68, %s70
    %p74 = scmp.eq.s32.totalorder %s13, 0
    %p75 = por %p73, %p74
    %p76 = scmp.ne.s32.totalorder %s68, %s70
    %p77 = scmp.eq.s32.totalorder %s18, 1
    %p78 = por %p76, %p77
    %p79 = scmp.ne.s32.totalorder %s70, %s71
    %p80 = scmp.eq.s32.totalorder %s18, 0
    %p81 = por %p79, %p80
    %p82 = scmp.ne.s32.totalorder %s70, %s71
    %p83 = scmp.eq.s32.totalorder %s19, 1
    %p84 = por %p82, %p83
    %p86 = scmp.ne.s32.totalorder %s71, %s85
    %p87 = scmp.eq.s32.totalorder %s19, 0
    %p88 = por %p86, %p87
    %s90 = sadd.s32 %s89, 1
    %p93 = scmp.eq.s32.totalorder %s13, 1
    %p94 = scmp.ne.s32.totalorder %s89, %s91
    %p95 = scmp.eq.s32.totalorder %s13, 0
    %p96 = por %p94, %p95
    %p97 = scmp.ne.s32.totalorder %s89, %s91
    %p98 = scmp.eq.s32.totalorder %s18, 1
    %p99 = por %p97, %p98
    %p100 = scmp.ne.s32.totalorder %s91, %s92
    %p101 = scmp.eq.s32.totalorder %s18, 0
    %p102 = por %p100, %p101
    %p103 = scmp.ne.s32.totalorder %s91, %s92
    %p104 = scmp.eq.s32.totalorder %s19, 1
    %p105 = por %p103, %p104
    %p107 = scmp.ne.s32.totalorder %s92, %s106
    %p108 = scmp.eq.s32.totalorder %s19, 0
    %p109 = por %p107, %p108
    %s111 = sadd.s32 %s110, 1
    %p114 = scmp.eq.s32.totalorder %s13, 1
    %p115 = scmp.ne.s32.totalorder %s110, %s112
    %p116 = scmp.eq.s32.totalorder %s13, 0
    %p117 = por %p115, %p116
    %p118 = scmp.ne.s32.totalorder %s110, %s112
    %p119 = scmp.eq.s32.totalorder %s18, 1
    %p120 = por %p118, %p119
    %p121 = scmp.ne.s32.totalorder %s112, %s113
    %p122 = scmp.eq.s32.totalorder %s18, 0
    %p123 = por %p121, %p122
    %p124 = scmp.ne.s32.totalorder %s112, %s113
    %p125 = scmp.eq.s32.totalorder %s19, 1
    %p126 = por %p124, %p125
    %p128 = scmp.ne.s32.totalorder %s113, %s127
    %p129 = scmp.eq.s32.totalorder %s19, 0
    %p130 = por %p128, %p129
    %s132 = sadd.s32 %s131, 1
    %p135 = scmp.eq.s32.totalorder %s13, 1
    %p136 = scmp.ne.s32.totalorder %s131, %s133
    %p137 = scmp.eq.s32.totalorder %s13, 0
    %p138 = por %p136, %p137
    %p139 = scmp.ne.s32.totalorder %s131, %s133
    %p140 = scmp.eq.s32.totalorder %s18, 1
    %p141 = por %p139, %p140
    %p142 = scmp.ne.s32.totalorder %s133, %s134
    %p143 = scmp.eq.s32.totalorder %s18, 0
    %p144 = por %p142, %p143
    %p145 = scmp.ne.s32.totalorder %s133, %s134
    %p146 = scmp.eq.s32.totalorder %s19, 1
    %p147 = por %p145, %p146
    %p149 = scmp.ne.s32.totalorder %s134, %s148
    %p150 = scmp.eq.s32.totalorder %s19, 0
    %p151 = por %p149, %p150
    %s153 = sadd.s32 %s152, 1
    %p156 = scmp.eq.s32.totalorder %s13, 1
    %p157 = scmp.ne.s32.totalorder %s152, %s154
    %p158 = scmp.eq.s32.totalorder %s13, 0
    %p159 = por %p157, %p158
    %p160 = scmp.ne.s32.totalorder %s152, %s154
    %p161 = scmp.eq.s32.totalorder %s18, 1
    %p162 = por %p160, %p161
    %p163 = scmp.ne.s32.totalorder %s154, %s155
    %p164 = scmp.eq.s32.totalorder %s18, 0
    %p165 = por %p163, %p164
    %p166 = scmp.ne.s32.totalorder %s154, %s155
    %p167 = scmp.eq.s32.totalorder %s19, 1
    %p168 = por %p166, %p167
    %p170 = scmp.ne.s32.totalorder %s155, %s169
    %p171 = scmp.eq.s32.totalorder %s19, 0
    %p172 = por %p170, %p171
    %s173 = ssub.s32 %s13, %s20
    %p174 = scmp.eq.s32.totalorder %s173, 0
    %s176 = sadd.s32 %s175, 1
    %s177 = scalar_select %p174, %s175, %s176
    %p180 = pneg %p174
    %p181 = scmp.eq.s32.totalorder %s13, 1
    %p182 = por %p180, %p181
    %p183 = scmp.ne.s32.totalorder %s175, %s178
    %p184 = scmp.eq.s32.totalorder %s13, 0
    %p185 = por %p183, %p184
    %p186 = scmp.ne.s32.totalorder %s175, %s178
    %p187 = scmp.eq.s32.totalorder %s18, 1
    %p188 = por %p186, %p187
    %p189 = scmp.ne.s32.totalorder %s178, %s179
    %p190 = scmp.eq.s32.totalorder %s18, 0
    %p191 = por %p189, %p190
    %p192 = scmp.ne.s32.totalorder %s178, %s179
    %p193 = scmp.eq.s32.totalorder %s19, 1
    %p194 = por %p192, %p193
    %p196 = scmp.ne.s32.totalorder %s179, %s195
    %p197 = scmp.eq.s32.totalorder %s19, 0
    %p198 = por %p196, %p197
    %p199 = scmp.le.s32.totalorder 1, %s13
    %p200 = scmp.lt.s32.totalorder %s13, 3
    %p201 = pnand %p199, %p200
    %p202 = pneg %p201
    // Predicated region
    $region9: #{tpu_custom_call.1} parent=5 // pred_check
      _
    $region10: #{tpu_custom_call.1} parent=5 // pred_check_branch
      %204 = sbr.rel (%p201) target = $region12
    $region11: #{tpu_custom_call.1} parent=5 // pred_region
      %s205 = ssub.s32 %s13, 1
      // Predicated region
      $region13: #{tpu_custom_call.1} parent=11 // pred_check
        %p206 = pneg %p60
      $region14: #{tpu_custom_call.1} parent=11 // pred_check_branch
        %208 = sbr.rel (%p206) target = $region16
      $region15: #{tpu_custom_call.1} parent=11 // pred_region
        _
      $region16: #{tpu_custom_call.1} parent=11 // pred_fallthru
        _
      // Predicated region
      $region17: #{tpu_custom_call.1} parent=11 // pred_check
        %p209 = pneg %p81
      $region18: #{tpu_custom_call.1} parent=11 // pred_check_branch
        %211 = sbr.rel (%p209) target = $region20
      $region19: #{tpu_custom_call.1} parent=11 // pred_region
        _
      $region20: #{tpu_custom_call.1} parent=11 // pred_fallthru
        _
      // Predicated region
      $region21: #{tpu_custom_call.1} parent=11 // pred_check
        %p212 = pneg %p102
      $region22: #{tpu_custom_call.1} parent=11 // pred_check_branch
        %214 = sbr.rel (%p212) target = $region24
      $region23: #{tpu_custom_call.1} parent=11 // pred_region
        _
      $region24: #{tpu_custom_call.1} parent=11 // pred_fallthru
        _
      // Predicated region
      $region25: #{tpu_custom_call.1} parent=11 // pred_check
        %p215 = pneg %p123
      $region26: #{tpu_custom_call.1} parent=11 // pred_check_branch
        %217 = sbr.rel (%p215) target = $region28
      $region27: #{tpu_custom_call.1} parent=11 // pred_region
        _
      $region28: #{tpu_custom_call.1} parent=11 // pred_fallthru
        _
      // Predicated region
      $region29: #{tpu_custom_call.1} parent=11 // pred_check
        %p218 = pneg %p144
      $region30: #{tpu_custom_call.1} parent=11 // pred_check_branch
        %220 = sbr.rel (%p218) target = $region32
      $region31: #{tpu_custom_call.1} parent=11 // pred_region
        _
      $region32: #{tpu_custom_call.1} parent=11 // pred_fallthru
        _
      // Predicated region
      $region33: #{tpu_custom_call.1} parent=11 // pred_check
        %p221 = pneg %p165
      $region34: #{tpu_custom_call.1} parent=11 // pred_check_branch
        %223 = sbr.rel (%p221) target = $region36
      $region35: #{tpu_custom_call.1} parent=11 // pred_region
        _
      $region36: #{tpu_custom_call.1} parent=11 // pred_fallthru
        _
    $region12: #{tpu_custom_call.1} parent=5 // pred_fallthru
      _
    %p224 = scmp.lt.s32.totalorder %s13, 2
    // Predicated region
    $region37: #{tpu_custom_call.1} parent=5 // pred_check
      %p225 = pneg %p224
    $region38: #{tpu_custom_call.1} parent=5 // pred_check_branch
      %227 = sbr.rel (%p225) target = $region40
    $region39: #{tpu_custom_call.1} parent=5 // pred_region
      // Predicated region
      $region41: #{tpu_custom_call.1} parent=39 // pred_check
        %p228 = pneg %p33
      $region42: #{tpu_custom_call.1} parent=39 // pred_check_branch
        %230 = sbr.rel (%p228) target = $region44
      $region43: #{tpu_custom_call.1} parent=39 // pred_region
        %s231 = smul.u32 32, %s13
        %p232 = scmp.lt.s32.totalorder %s231, 63
        %s233 = scalar_select %p232, %s231, 63
        %s234 = smul.addr %s233, 8
        %s235 = scalar_lea.vmem %s0, %s234
        %s236 = smul.u32 32, %s13
      $region44: #{tpu_custom_call.1} parent=39 // pred_fallthru
        _
    $region40: #{tpu_custom_call.1} parent=5 // pred_fallthru
      _
    %p237 = scmp.le.s32.totalorder 1, %s13
    %p238 = scmp.lt.s32.totalorder %s13, 3
    %p239 = pnand %p237, %p238
    %p240 = pneg %p239
    // Predicated region
    $region45: #{tpu_custom_call.1} parent=5 // pred_check
      _
    $region46: #{tpu_custom_call.1} parent=5 // pred_check_branch
      %242 = sbr.rel (%p239) target = $region48
    $region47: #{tpu_custom_call.1} parent=5 // pred_region
      %s243 = ssub.s32 %s13, 1
      %s244 = smul.u32 32, %s18
      %p245 = scmp.lt.s32.totalorder %s244, 63
      %s246 = scalar_select %p245, %s244, 63
      %s247 = smul.addr %s246, 8
      %s248 = scalar_lea.vmem %s0, %s247
      %p249 = pneg %p39
      %p250 = pneg %p36
      %p251 = pneg %p60
      %p252 = pneg %p57
      %p253 = pneg %p81
      %p254 = pneg %p78
      %p255 = pneg %p102
      %p256 = pneg %p99
      %p257 = pneg %p123
      %p258 = pneg %p120
      %p259 = pneg %p144
      %p260 = pneg %p141
      %p261 = pneg %p165
      %p262 = pneg %p162
      %p263 = pneg %p191
      %p264 = pneg %p188
      %s265 = smul.u32 32, %s18
      %p266 = scmp.lt.s32.totalorder %s265, 63
      %s267 = scalar_select %p266, %s265, 63
      %s268 = smul.addr %s267, 8
      %s269 = scalar_lea.vmem %s7, %s268
      %s270 = smul.u32 32, %s18
      %p271 = scmp.lt.s32.totalorder %s270, 63
      %s272 = scalar_select %p271, %s270, 63
      %s273 = smul.addr %s272, 8
      %s274 = scalar_lea.vmem %s0, %s273
      %s275 = smul.u32 32, %s18
      %s276 = smul.u32 32, %s18
      %p277 = scmp.lt.s32.totalorder %s276, 63
      %s278 = scalar_select %p277, %s276, 63
      %s279 = smul.addr %s278, 8
      %s280 = scalar_lea.vmem %s7, %s279
      %s281 = smul.u32 32, %s18
      %v282 = vld [vmem:[%s274] sm:$0xff]
      %v283 = vld [vmem:[%s274 + $0x8] sm:$0xff]
      %v284 = vld [vmem:[%s274 + $0x10] sm:$0xff]
      %v285 = vld [vmem:[%s274 + $0x18] sm:$0xff]
      %v286 = vld [vmem:[%s274 + $0x20] sm:$0xff]
      %v287 = vld [vmem:[%s274 + $0x28] sm:$0xff]
      %v288 = vld [vmem:[%s274 + $0x30] sm:$0xff]
      %v289 = vld [vmem:[%s274 + $0x38] sm:$0xff]
      %v290 = vld [vmem:[%s274 + $0x40] sm:$0xff]
      %v291 = vld [vmem:[%s274 + $0x48] sm:$0xff]
      %v292 = vld [vmem:[%s274 + $0x50] sm:$0xff]
      %v293 = vld [vmem:[%s274 + $0x58] sm:$0xff]
      %v294 = vld [vmem:[%s274 + $0x60] sm:$0xff]
      %v295 = vld [vmem:[%s274 + $0x68] sm:$0xff]
      %v296 = vld [vmem:[%s274 + $0x70] sm:$0xff]
      %v297 = vld [vmem:[%s274 + $0x78] sm:$0xff]
      %v298 = vld [vmem:[%s274 + $0x80] sm:$0xff]
      %v299 = vld [vmem:[%s274 + $0x88] sm:$0xff]
      %v300 = vld [vmem:[%s274 + $0x90] sm:$0xff]
      %v301 = vld [vmem:[%s274 + $0x98] sm:$0xff]
      %v302 = vld [vmem:[%s274 + $0xa0] sm:$0xff]
      %v303 = vld [vmem:[%s274 + $0xa8] sm:$0xff]
      %v304 = vld [vmem:[%s274 + $0xb0] sm:$0xff]
      %v305 = vld [vmem:[%s274 + $0xb8] sm:$0xff]
      %v306 = vld [vmem:[%s274 + $0xc0] sm:$0xff]
      %v307 = vld [vmem:[%s274 + $0xc8] sm:$0xff]
      %v308 = vld [vmem:[%s274 + $0xd0] sm:$0xff]
      %v309 = vld [vmem:[%s274 + $0xd8] sm:$0xff]
      %v310 = vld [vmem:[%s274 + $0xe0] sm:$0xff]
      %v311 = vld [vmem:[%s274 + $0xe8] sm:$0xff]
      %v312 = vld [vmem:[%s274 + $0xf0] sm:$0xff]
      %v313 = vld [vmem:[%s274 + $0xf8] sm:$0xff]
      %v314 = vmax.f32 %v282, 0.0
      %v315 = vmax.f32 %v283, 0.0
      %v316 = vmax.f32 %v284, 0.0
      %v317 = vmax.f32 %v285, 0.0
      %v318 = vmax.f32 %v286, 0.0
      %v319 = vmax.f32 %v287, 0.0
      %v320 = vmax.f32 %v288, 0.0
      %v321 = vmax.f32 %v289, 0.0
      %v322 = vmax.f32 %v290, 0.0
      %v323 = vmax.f32 %v291, 0.0
      %v324 = vmax.f32 %v292, 0.0
      %v325 = vmax.f32 %v293, 0.0
      %v326 = vmax.f32 %v294, 0.0
      %v327 = vmax.f32 %v295, 0.0
      %v328 = vmax.f32 %v296, 0.0
      %v329 = vmax.f32 %v297, 0.0
      %v330 = vmax.f32 %v298, 0.0
      %v331 = vmax.f32 %v299, 0.0
      %v332 = vmax.f32 %v300, 0.0
      %v333 = vmax.f32 %v301, 0.0
      %v334 = vmax.f32 %v302, 0.0
      %v335 = vmax.f32 %v303, 0.0
      %v336 = vmax.f32 %v304, 0.0
      %v337 = vmax.f32 %v305, 0.0
      %v338 = vmax.f32 %v306, 0.0
      %v339 = vmax.f32 %v307, 0.0
      %v340 = vmax.f32 %v308, 0.0
      %v341 = vmax.f32 %v309, 0.0
      %v342 = vmax.f32 %v310, 0.0
      %v343 = vmax.f32 %v311, 0.0
      %v344 = vmax.f32 %v312, 0.0
      %v345 = vmax.f32 %v313, 0.0
      %v346 = vld [vmem:[%s1] sm:$0xff]
      %v347 = vld [vmem:[%s1 + $0x8] sm:$0xff]
      %v348 = vld [vmem:[%s1 + $0x10] sm:$0xff]
      %v349 = vld [vmem:[%s1 + $0x18] sm:$0xff]
      %v350 = vld [vmem:[%s2] sm:$0x1]
      %v352 = vlaneseq
      %v353 = vshrl.u32 %v352, 7
      %v354 = vsub.s32 0, %v353
      %v355 = vrot.slane %v350, %v354
      %vm357 = vcmask 261120
      %v359 = vsel %vm357, %v314, 0
      %v362 = vsel %vm357, %v315, 0
      %v365 = vsel %vm357, %v316, 0
      %v368 = vsel %vm357, %v317, 0
      %v371 = vsel %vm357, %v318, 0
      %v374 = vsel %vm357, %v319, 0
      %v377 = vsel %vm357, %v320, 0
      %v380 = vsel %vm357, %v321, 0
      %v383 = vsel %vm357, %v322, 0
      %v386 = vsel %vm357, %v323, 0
      %v389 = vsel %vm357, %v324, 0
      %v392 = vsel %vm357, %v325, 0
      %v395 = vsel %vm357, %v326, 0
      %v398 = vsel %vm357, %v327, 0
      %v401 = vsel %vm357, %v328, 0
      %v404 = vsel %vm357, %v329, 0
      %v407 = vsel %vm357, %v330, 0
      %v410 = vsel %vm357, %v331, 0
      %v413 = vsel %vm357, %v332, 0
      %v416 = vsel %vm357, %v333, 0
      %v419 = vsel %vm357, %v334, 0
      %v422 = vsel %vm357, %v335, 0
      %v425 = vsel %vm357, %v336, 0
      %v428 = vsel %vm357, %v337, 0
      %v431 = vsel %vm357, %v338, 0
      %v434 = vsel %vm357, %v339, 0
      %v437 = vsel %vm357, %v340, 0
      %v440 = vsel %vm357, %v341, 0
      %v443 = vsel %vm357, %v342, 0
      %v446 = vsel %vm357, %v343, 0
      %v449 = vsel %vm357, %v344, 0
      %v452 = vsel %vm357, %v345, 0
      %454 = vmatprep.subr.mxu0 0.0
      %455 = vmatpush1.msra.mxu0 %v346
      %456 = vmatprep.subr.mxu0 0.0
      %457 = vmatpush1.msra.mxu0 %v347
      %458 = vmatprep.subr.mxu0 0.0
      %459 = vmatpush1.msra.mxu0 %v348
      %460 = vmatprep.subr.mxu0 0.0
      %461 = vmatpush1.msra.mxu0 %v349
      %462 = vmatprep.subr.mxu0 0.0
      %463 = vmatpush1.msra.mxu0 0.0
      %464 = vmatprep.subr.mxu0 0.0
      %465 = vmatpush1.msra.mxu0 0.0
      %466 = vmatprep.subr.mxu0 0.0
      %467 = vmatpush1.msra.mxu0 0.0
      %468 = vmatprep.subr.mxu0 0.0
      %469 = vmatpush1.msra.mxu0 0.0
      %470 = vmatprep.subr.mxu0 0.0
      %471 = vmatpush1.msra.mxu0 0.0
      %472 = vmatprep.subr.mxu0 0.0
      %473 = vmatpush1.msra.mxu0 0.0
      %474 = vmatprep.subr.mxu0 0.0
      %475 = vmatpush1.msra.mxu0 0.0
      %476 = vmatprep.subr.mxu0 0.0
      %477 = vmatpush1.msra.mxu0 0.0
      %478 = vmatprep.subr.mxu0 0.0
      %479 = vmatpush1.msra.mxu0 0.0
      %480 = vmatprep.subr.mxu0 0.0
      %481 = vmatpush1.msra.mxu0 0.0
      %482 = vmatprep.subr.mxu0 0.0
      %483 = vmatpush1.msra.mxu0 0.0
      %484 = vmatprep.subr.mxu0 0.0
      %485 = vmatpush1.msra.mxu0 0.0
      %486 = vmatprep.subr.mxu0 0.0
      %487 = vmatpush1.msra.mxu0 0.0
      %488 = vmatprep.subr.mxu0 0.0
      %489 = vmatpush1.msra.mxu0 0.0
      %490 = vmatprep.subr.mxu0 0.0
      %491 = vmatpush1.msra.mxu0 0.0
      %492 = vmatprep.subr.mxu0 0.0
      %493 = vmatpush1.msra.mxu0 0.0
      %494 = vmatprep.subr.mxu0 0.0
      %495 = vmatpush1.msra.mxu0 0.0
      %496 = vmatprep.subr.mxu0 0.0
      %497 = vmatpush1.msra.mxu0 0.0
      %498 = vmatprep.subr.mxu0 0.0
      %499 = vmatpush1.msra.mxu0 0.0
      %500 = vmatprep.subr.mxu0 0.0
      %501 = vmatpush1.msra.mxu0 0.0
      %502 = vmatprep.subr.mxu0 0.0
      %503 = vmatpush1.msra.mxu0 0.0
      %504 = vmatprep.subr.mxu0 0.0
      %505 = vmatpush1.msra.mxu0 0.0
      %506 = vmatprep.subr.mxu0 0.0
      %507 = vmatpush1.msra.mxu0 0.0
      %508 = vmatprep.subr.mxu0 0.0
      %509 = vmatpush1.msra.mxu0 0.0
      %510 = vmatprep.subr.mxu0 0.0
      %511 = vmatpush1.msra.mxu0 0.0
      %512 = vmatprep.subr.mxu0 0.0
      %513 = vmatpush1.msra.mxu0 0.0
      %514 = vmatprep.subr.mxu0 0.0
      %515 = vmatpush1.msra.mxu0 0.0
      %516 = vmatprep.subr.mxu0 0.0
      %517 = vmatpush1.msra.mxu0 0.0
      %518 = vmatprep.mubr.f32.mxu0 0.0
      %519 = vmatmul.mubr.f32.gmra.mrb[0].mxu0 %v359
      %v520 = vpop.f32.mrb[0].mxu0
      %v521 = vadd.f32 %v355, %v520
      %v522 = vpop.f32.mrb[0].mxu0
      %523 = vmatprep.mubr.f32.mxu0 0.0
      %524 = vmatmul.mubr.f32.gmra.mrb[0].mxu0 %v362
      %v525 = vpop.f32.mrb[0].mxu0
      %v526 = vadd.f32 %v355, %v525
      %v527 = vpop.f32.mrb[0].mxu0
      %528 = vmatprep.mubr.f32.mxu0 0.0
      %529 = vmatmul.mubr.f32.gmra.mrb[0].mxu0 %v365
      %v530 = vpop.f32.mrb[0].mxu0
      %v531 = vadd.f32 %v355, %v530
      %v532 = vpop.f32.mrb[0].mxu0
      %533 = vmatprep.mubr.f32.mxu0 0.0
      %534 = vmatmul.mubr.f32.gmra.mrb[0].mxu0 %v368
      %v535 = vpop.f32.mrb[0].mxu0
      %v536 = vadd.f32 %v355, %v535
      %v537 = vpop.f32.mrb[0].mxu0
      %538 = vmatprep.mubr.f32.mxu0 0.0
      %539 = vmatmul.mubr.f32.gmra.mrb[0].mxu0 %v371
      %v540 = vpop.f32.mrb[0].mxu0
      %v541 = vadd.f32 %v355, %v540
      %v542 = vpop.f32.mrb[0].mxu0
      %543 = vmatprep.mubr.f32.mxu0 0.0
      %544 = vmatmul.mubr.f32.gmra.mrb[0].mxu0 %v374
      %v545 = vpop.f32.mrb[0].mxu0
      %v546 = vadd.f32 %v355, %v545
      %v547 = vpop.f32.mrb[0].mxu0
      %548 = vmatprep.mubr.f32.mxu0 0.0
      %549 = vmatmul.mubr.f32.gmra.mrb[0].mxu0 %v377
      %v550 = vpop.f32.mrb[0].mxu0
      %v551 = vadd.f32 %v355, %v550
      %v552 = vpop.f32.mrb[0].mxu0
      %553 = vmatprep.mubr.f32.mxu0 0.0
      %554 = vmatmul.mubr.f32.gmra.mrb[0].mxu0 %v380
      %v555 = vpop.f32.mrb[0].mxu0
      %v556 = vadd.f32 %v355, %v555
      %v557 = vpop.f32.mrb[0].mxu0
      %558 = vmatprep.mubr.f32.mxu0 0.0
      %559 = vmatmul.mubr.f32.gmra.mrb[0].mxu0 %v383
      %v560 = vpop.f32.mrb[0].mxu0
      %v561 = vadd.f32 %v355, %v560
      %v562 = vpop.f32.mrb[0].mxu0
      %563 = vmatprep.mubr.f32.mxu0 0.0
      %564 = vmatmul.mubr.f32.gmra.mrb[0].mxu0 %v386
      %v565 = vpop.f32.mrb[0].mxu0
      %v566 = vadd.f32 %v355, %v565
      %v567 = vpop.f32.mrb[0].mxu0
      %568 = vmatprep.mubr.f32.mxu0 0.0
      %569 = vmatmul.mubr.f32.gmra.mrb[0].mxu0 %v389
      %v570 = vpop.f32.mrb[0].mxu0
      %v571 = vadd.f32 %v355, %v570
      %v572 = vpop.f32.mrb[0].mxu0
      %573 = vmatprep.mubr.f32.mxu0 0.0
      %574 = vmatmul.mubr.f32.gmra.mrb[0].mxu0 %v392
      %v575 = vpop.f32.mrb[0].mxu0
      %v576 = vadd.f32 %v355, %v575
      %v577 = vpop.f32.mrb[0].mxu0
      %578 = vmatprep.mubr.f32.mxu0 0.0
      %579 = vmatmul.mubr.f32.gmra.mrb[0].mxu0 %v395
      %v580 = vpop.f32.mrb[0].mxu0
      %v581 = vadd.f32 %v355, %v580
      %v582 = vpop.f32.mrb[0].mxu0
      %583 = vmatprep.mubr.f32.mxu0 0.0
      %584 = vmatmul.mubr.f32.gmra.mrb[0].mxu0 %v398
      %v585 = vpop.f32.mrb[0].mxu0
      %v586 = vadd.f32 %v355, %v585
      %v587 = vpop.f32.mrb[0].mxu0
      %588 = vmatprep.mubr.f32.mxu0 0.0
      %589 = vmatmul.mubr.f32.gmra.mrb[0].mxu0 %v401
      %v590 = vpop.f32.mrb[0].mxu0
      %v591 = vadd.f32 %v355, %v590
      %v592 = vpop.f32.mrb[0].mxu0
      %593 = vmatprep.mubr.f32.mxu0 0.0
      %594 = vmatmul.mubr.f32.gmra.mrb[0].mxu0 %v404
      %v595 = vpop.f32.mrb[0].mxu0
      %v596 = vadd.f32 %v355, %v595
      %v597 = vpop.f32.mrb[0].mxu0
      %598 = vmatprep.mubr.f32.mxu0 0.0
      %599 = vmatmul.mubr.f32.gmra.mrb[0].mxu0 %v407
      %v600 = vpop.f32.mrb[0].mxu0
      %v601 = vadd.f32 %v355, %v600
      %v602 = vpop.f32.mrb[0].mxu0
      %603 = vmatprep.mubr.f32.mxu0 0.0
      %604 = vmatmul.mubr.f32.gmra.mrb[0].mxu0 %v410
      %v605 = vpop.f32.mrb[0].mxu0
      %v606 = vadd.f32 %v355, %v605
      %v607 = vpop.f32.mrb[0].mxu0
      %608 = vmatprep.mubr.f32.mxu0 0.0
      %609 = vmatmul.mubr.f32.gmra.mrb[0].mxu0 %v413
      %v610 = vpop.f32.mrb[0].mxu0
      %v611 = vadd.f32 %v355, %v610
      %v612 = vpop.f32.mrb[0].mxu0
      %613 = vmatprep.mubr.f32.mxu0 0.0
      %614 = vmatmul.mubr.f32.gmra.mrb[0].mxu0 %v416
      %v615 = vpop.f32.mrb[0].mxu0
      %v616 = vadd.f32 %v355, %v615
      %v617 = vpop.f32.mrb[0].mxu0
      %618 = vmatprep.mubr.f32.mxu0 0.0
      %619 = vmatmul.mubr.f32.gmra.mrb[0].mxu0 %v419
      %v620 = vpop.f32.mrb[0].mxu0
      %v621 = vadd.f32 %v355, %v620
      %v622 = vpop.f32.mrb[0].mxu0
      %623 = vmatprep.mubr.f32.mxu0 0.0
      %624 = vmatmul.mubr.f32.gmra.mrb[0].mxu0 %v422
      %v625 = vpop.f32.mrb[0].mxu0
      %v626 = vadd.f32 %v355, %v625
      %v627 = vpop.f32.mrb[0].mxu0
      %628 = vmatprep.mubr.f32.mxu0 0.0
      %629 = vmatmul.mubr.f32.gmra.mrb[0].mxu0 %v425
      %v630 = vpop.f32.mrb[0].mxu0
      %v631 = vadd.f32 %v355, %v630
      %v632 = vpop.f32.mrb[0].mxu0
      %633 = vmatprep.mubr.f32.mxu0 0.0
      %634 = vmatmul.mubr.f32.gmra.mrb[0].mxu0 %v428
      %v635 = vpop.f32.mrb[0].mxu0
      %v636 = vadd.f32 %v355, %v635
      %v637 = vpop.f32.mrb[0].mxu0
      %638 = vmatprep.mubr.f32.mxu0 0.0
      %639 = vmatmul.mubr.f32.gmra.mrb[0].mxu0 %v431
      %v640 = vpop.f32.mrb[0].mxu0
      %v641 = vadd.f32 %v355, %v640
      %v642 = vpop.f32.mrb[0].mxu0
      %643 = vmatprep.mubr.f32.mxu0 0.0
      %644 = vmatmul.mubr.f32.gmra.mrb[0].mxu0 %v434
      %v645 = vpop.f32.mrb[0].mxu0
      %v646 = vadd.f32 %v355, %v645
      %v647 = vpop.f32.mrb[0].mxu0
      %648 = vmatprep.mubr.f32.mxu0 0.0
      %649 = vmatmul.mubr.f32.gmra.mrb[0].mxu0 %v437
      %v650 = vpop.f32.mrb[0].mxu0
      %v651 = vadd.f32 %v355, %v650
      %v652 = vpop.f32.mrb[0].mxu0
      %653 = vmatprep.mubr.f32.mxu0 0.0
      %654 = vmatmul.mubr.f32.gmra.mrb[0].mxu0 %v440
      %v655 = vpop.f32.mrb[0].mxu0
      %v656 = vadd.f32 %v355, %v655
      %v657 = vpop.f32.mrb[0].mxu0
      %658 = vmatprep.mubr.f32.mxu0 0.0
      %659 = vmatmul.mubr.f32.gmra.mrb[0].mxu0 %v443
      %v660 = vpop.f32.mrb[0].mxu0
      %v661 = vadd.f32 %v355, %v660
      %v662 = vpop.f32.mrb[0].mxu0
      %663 = vmatprep.mubr.f32.mxu0 0.0
      %664 = vmatmul.mubr.f32.gmra.mrb[0].mxu0 %v446
      %v665 = vpop.f32.mrb[0].mxu0
      %v666 = vadd.f32 %v355, %v665
      %v667 = vpop.f32.mrb[0].mxu0
      %668 = vmatprep.mubr.f32.mxu0 0.0
      %669 = vmatmul.mubr.f32.gmra.mrb[0].mxu0 %v449
      %v670 = vpop.f32.mrb[0].mxu0
      %v671 = vadd.f32 %v355, %v670
      %v672 = vpop.f32.mrb[0].mxu0
      %673 = vmatprep.mubr.f32.mxu0 0.0
      %674 = vmatmul.mubr.f32.gmra.mrb[0].mxu0 %v452
      %v675 = vpop.f32.mrb[0].mxu0
      %v676 = vadd.f32 %v355, %v675
      %v677 = vpop.f32.mrb[0].mxu0
      %678 = vdwg.mxu0
      %v679 = vmax.f32 %v521, 0.0
      %v680 = vmax.f32 %v526, 0.0
      %v681 = vmax.f32 %v531, 0.0
      %v682 = vmax.f32 %v536, 0.0
      %v683 = vmax.f32 %v541, 0.0
      %v684 = vmax.f32 %v546, 0.0
      %v685 = vmax.f32 %v551, 0.0
      %v686 = vmax.f32 %v556, 0.0
      %v687 = vmax.f32 %v561, 0.0
      %v688 = vmax.f32 %v566, 0.0
      %v689 = vmax.f32 %v571, 0.0
      %v690 = vmax.f32 %v576, 0.0
      %v691 = vmax.f32 %v581, 0.0
      %v692 = vmax.f32 %v586, 0.0
      %v693 = vmax.f32 %v591, 0.0
      %v694 = vmax.f32 %v596, 0.0
      %v695 = vmax.f32 %v601, 0.0
      %v696 = vmax.f32 %v606, 0.0
      %v697 = vmax.f32 %v611, 0.0
      %v698 = vmax.f32 %v616, 0.0
      %v699 = vmax.f32 %v621, 0.0
      %v700 = vmax.f32 %v626, 0.0
      %v701 = vmax.f32 %v631, 0.0
      %v702 = vmax.f32 %v636, 0.0
      %v703 = vmax.f32 %v641, 0.0
      %v704 = vmax.f32 %v646, 0.0
      %v705 = vmax.f32 %v651, 0.0
      %v706 = vmax.f32 %v656, 0.0
      %v707 = vmax.f32 %v661, 0.0
      %v708 = vmax.f32 %v666, 0.0
      %v709 = vmax.f32 %v671, 0.0
      %v710 = vmax.f32 %v676, 0.0
      %v711 = vld [vmem:[%s3] sm:$0xff]
      %v712 = vld [vmem:[%s3 + $0x8] sm:$0xff]
      %v713 = vld [vmem:[%s3 + $0x10] sm:$0xff]
      %v714 = vld [vmem:[%s3 + $0x18] sm:$0xff]
      %v715 = vld [vmem:[%s3 + $0x20] sm:$0xff]
      %v716 = vld [vmem:[%s3 + $0x28] sm:$0xff]
      %v717 = vld [vmem:[%s3 + $0x30] sm:$0xff]
      %v718 = vld [vmem:[%s3 + $0x38] sm:$0xff]
      %v719 = vld [vmem:[%s3 + $0x40] sm:$0xff]
      %v720 = vld [vmem:[%s3 + $0x48] sm:$0xff]
      %v721 = vld [vmem:[%s3 + $0x50] sm:$0xff]
      %v722 = vld [vmem:[%s3 + $0x58] sm:$0xff]
      %v723 = vld [vmem:[%s3 + $0x60] sm:$0xff]
      %v724 = vld [vmem:[%s3 + $0x68] sm:$0xff]
      %v725 = vld [vmem:[%s3 + $0x70] sm:$0xff]
      %v726 = vld [vmem:[%s3 + $0x78] sm:$0xff]
      %v727 = vld [vmem:[%s4] sm:$0x1]
      %v729 = vlaneseq
      %v730 = vshrl.u32 %v729, 7
      %v731 = vsub.s32 0, %v730
      %v732 = vrot.slane %v727, %v731
      %734 = vmatprep.subr.mxu0 0.0
      %735 = vmatpush1.msra.mxu0 %v711
      %736 = vmatprep.subr.mxu0 0.0
      %737 = vmatpush1.msra.mxu0 %v712
      %738 = vmatprep.subr.mxu0 0.0
      %739 = vmatpush1.msra.mxu0 %v713
      %740 = vmatprep.subr.mxu0 0.0
      %741 = vmatpush1.msra.mxu0 %v714
      %742 = vmatprep.subr.mxu0 0.0
      %743 = vmatpush1.msra.mxu0 %v715
      %744 = vmatprep.subr.mxu0 0.0
      %745 = vmatpush1.msra.mxu0 %v716
      %746 = vmatprep.subr.mxu0 0.0
      %747 = vmatpush1.msra.mxu0 %v717
      %748 = vmatprep.subr.mxu0 0.0
      %749 = vmatpush1.msra.mxu0 %v718
      %750 = vmatprep.subr.mxu0 0.0
      %751 = vmatpush1.msra.mxu0 %v719
      %752 = vmatprep.subr.mxu0 0.0
      %753 = vmatpush1.msra.mxu0 %v720
      %754 = vmatprep.subr.mxu0 0.0
      %755 = vmatpush1.msra.mxu0 %v721
      %756 = vmatprep.subr.mxu0 0.0
      %757 = vmatpush1.msra.mxu0 %v722
      %758 = vmatprep.subr.mxu0 0.0
      %759 = vmatpush1.msra.mxu0 %v723
      %760 = vmatprep.subr.mxu0 0.0
      %761 = vmatpush1.msra.mxu0 %v724
      %762 = vmatprep.subr.mxu0 0.0
      %763 = vmatpush1.msra.mxu0 %v725
      %764 = vmatprep.subr.mxu0 0.0
      %765 = vmatpush1.msra.mxu0 %v726
      %766 = vmatprep.subr.mxu0 0.0
      %767 = vmatpush1.msra.mxu0 0.0
      %768 = vmatprep.subr.mxu0 0.0
      %769 = vmatpush1.msra.mxu0 0.0
      %770 = vmatprep.subr.mxu0 0.0
      %771 = vmatpush1.msra.mxu0 0.0
      %772 = vmatprep.subr.mxu0 0.0
      %773 = vmatpush1.msra.mxu0 0.0
      %774 = vmatprep.subr.mxu0 0.0
      %775 = vmatpush1.msra.mxu0 0.0
      %776 = vmatprep.subr.mxu0 0.0
      %777 = vmatpush1.msra.mxu0 0.0
      %778 = vmatprep.subr.mxu0 0.0
      %779 = vmatpush1.msra.mxu0 0.0
      %780 = vmatprep.subr.mxu0 0.0
      %781 = vmatpush1.msra.mxu0 0.0
      %782 = vmatprep.subr.mxu0 0.0
      %783 = vmatpush1.msra.mxu0 0.0
      %784 = vmatprep.subr.mxu0 0.0
      %785 = vmatpush1.msra.mxu0 0.0
      %786 = vmatprep.subr.mxu0 0.0
      %787 = vmatpush1.msra.mxu0 0.0
      %788 = vmatprep.subr.mxu0 0.0
      %789 = vmatpush1.msra.mxu0 0.0
      %790 = vmatprep.subr.mxu0 0.0
      %791 = vmatpush1.msra.mxu0 0.0
      %792 = vmatprep.subr.mxu0 0.0
      %793 = vmatpush1.msra.mxu0 0.0
      %794 = vmatprep.subr.mxu0 0.0
      %795 = vmatpush1.msra.mxu0 0.0
      %796 = vmatprep.subr.mxu0 0.0
      %797 = vmatpush1.msra.mxu0 0.0
      %798 = vmatprep.mubr.f32.mxu0 0.0
      %799 = vmatmul.mubr.f32.gmra.mrb[0].mxu0 %v679
      %v800 = vpop.f32.mrb[0].mxu0
      %v801 = vadd.f32 %v732, %v800
      %v802 = vpop.f32.mrb[0].mxu0
      %803 = vmatprep.mubr.f32.mxu0 0.0
      %804 = vmatmul.mubr.f32.gmra.mrb[0].mxu0 %v680
      %v805 = vpop.f32.mrb[0].mxu0
      %v806 = vadd.f32 %v732, %v805
      %v807 = vpop.f32.mrb[0].mxu0
      %808 = vmatprep.mubr.f32.mxu0 0.0
      %809 = vmatmul.mubr.f32.gmra.mrb[0].mxu0 %v681
      %v810 = vpop.f32.mrb[0].mxu0
      %v811 = vadd.f32 %v732, %v810
      %v812 = vpop.f32.mrb[0].mxu0
      %813 = vmatprep.mubr.f32.mxu0 0.0
      %814 = vmatmul.mubr.f32.gmra.mrb[0].mxu0 %v682
      %v815 = vpop.f32.mrb[0].mxu0
      %v816 = vadd.f32 %v732, %v815
      %v817 = vpop.f32.mrb[0].mxu0
      %818 = vmatprep.mubr.f32.mxu0 0.0
      %819 = vmatmul.mubr.f32.gmra.mrb[0].mxu0 %v683
      %v820 = vpop.f32.mrb[0].mxu0
      %v821 = vadd.f32 %v732, %v820
      %v822 = vpop.f32.mrb[0].mxu0
      %823 = vmatprep.mubr.f32.mxu0 0.0
      %824 = vmatmul.mubr.f32.gmra.mrb[0].mxu0 %v684
      %v825 = vpop.f32.mrb[0].mxu0
      %v826 = vadd.f32 %v732, %v825
      %v827 = vpop.f32.mrb[0].mxu0
      %828 = vmatprep.mubr.f32.mxu0 0.0
      %829 = vmatmul.mubr.f32.gmra.mrb[0].mxu0 %v685
      %v830 = vpop.f32.mrb[0].mxu0
      %v831 = vadd.f32 %v732, %v830
      %v832 = vpop.f32.mrb[0].mxu0
      %833 = vmatprep.mubr.f32.mxu0 0.0
      %834 = vmatmul.mubr.f32.gmra.mrb[0].mxu0 %v686
      %v835 = vpop.f32.mrb[0].mxu0
      %v836 = vadd.f32 %v732, %v835
      %v837 = vpop.f32.mrb[0].mxu0
      %838 = vmatprep.mubr.f32.mxu0 0.0
      %839 = vmatmul.mubr.f32.gmra.mrb[0].mxu0 %v687
      %v840 = vpop.f32.mrb[0].mxu0
      %v841 = vadd.f32 %v732, %v840
      %v842 = vpop.f32.mrb[0].mxu0
      %843 = vmatprep.mubr.f32.mxu0 0.0
      %844 = vmatmul.mubr.f32.gmra.mrb[0].mxu0 %v688
      %v845 = vpop.f32.mrb[0].mxu0
      %v846 = vadd.f32 %v732, %v845
      %v847 = vpop.f32.mrb[0].mxu0
      %848 = vmatprep.mubr.f32.mxu0 0.0
      %849 = vmatmul.mubr.f32.gmra.mrb[0].mxu0 %v689
      %v850 = vpop.f32.mrb[0].mxu0
      %v851 = vadd.f32 %v732, %v850
      %v852 = vpop.f32.mrb[0].mxu0
      %853 = vmatprep.mubr.f32.mxu0 0.0
      %854 = vmatmul.mubr.f32.gmra.mrb[0].mxu0 %v690
      %v855 = vpop.f32.mrb[0].mxu0
      %v856 = vadd.f32 %v732, %v855
      %v857 = vpop.f32.mrb[0].mxu0
      %858 = vmatprep.mubr.f32.mxu0 0.0
      %859 = vmatmul.mubr.f32.gmra.mrb[0].mxu0 %v691
      %v860 = vpop.f32.mrb[0].mxu0
      %v861 = vadd.f32 %v732, %v860
      %v862 = vpop.f32.mrb[0].mxu0
      %863 = vmatprep.mubr.f32.mxu0 0.0
      %864 = vmatmul.mubr.f32.gmra.mrb[0].mxu0 %v692
      %v865 = vpop.f32.mrb[0].mxu0
      %v866 = vadd.f32 %v732, %v865
      %v867 = vpop.f32.mrb[0].mxu0
      %868 = vmatprep.mubr.f32.mxu0 0.0
      %869 = vmatmul.mubr.f32.gmra.mrb[0].mxu0 %v693
      %v870 = vpop.f32.mrb[0].mxu0
      %v871 = vadd.f32 %v732, %v870
      %v872 = vpop.f32.mrb[0].mxu0
      %873 = vmatprep.mubr.f32.mxu0 0.0
      %874 = vmatmul.mubr.f32.gmra.mrb[0].mxu0 %v694
      %v875 = vpop.f32.mrb[0].mxu0
      %v876 = vadd.f32 %v732, %v875
      %v877 = vpop.f32.mrb[0].mxu0
      %878 = vmatprep.mubr.f32.mxu0 0.0
      %879 = vmatmul.mubr.f32.gmra.mrb[0].mxu0 %v695
      %v880 = vpop.f32.mrb[0].mxu0
      %v881 = vadd.f32 %v732, %v880
      %v882 = vpop.f32.mrb[0].mxu0
      %883 = vmatprep.mubr.f32.mxu0 0.0
      %884 = vmatmul.mubr.f32.gmra.mrb[0].mxu0 %v696
      %v885 = vpop.f32.mrb[0].mxu0
      %v886 = vadd.f32 %v732, %v885
      %v887 = vpop.f32.mrb[0].mxu0
      %888 = vmatprep.mubr.f32.mxu0 0.0
      %889 = vmatmul.mubr.f32.gmra.mrb[0].mxu0 %v697
      %v890 = vpop.f32.mrb[0].mxu0
      %v891 = vadd.f32 %v732, %v890
      %v892 = vpop.f32.mrb[0].mxu0
      %893 = vmatprep.mubr.f32.mxu0 0.0
      %894 = vmatmul.mubr.f32.gmra.mrb[0].mxu0 %v698
      %v895 = vpop.f32.mrb[0].mxu0
      %v896 = vadd.f32 %v732, %v895
      %v897 = vpop.f32.mrb[0].mxu0
      %898 = vmatprep.mubr.f32.mxu0 0.0
      %899 = vmatmul.mubr.f32.gmra.mrb[0].mxu0 %v699
      %v900 = vpop.f32.mrb[0].mxu0
      %v901 = vadd.f32 %v732, %v900
      %v902 = vpop.f32.mrb[0].mxu0
      %903 = vmatprep.mubr.f32.mxu0 0.0
      %904 = vmatmul.mubr.f32.gmra.mrb[0].mxu0 %v700
      %v905 = vpop.f32.mrb[0].mxu0
      %v906 = vadd.f32 %v732, %v905
      %v907 = vpop.f32.mrb[0].mxu0
      %908 = vmatprep.mubr.f32.mxu0 0.0
      %909 = vmatmul.mubr.f32.gmra.mrb[0].mxu0 %v701
      %v910 = vpop.f32.mrb[0].mxu0
      %v911 = vadd.f32 %v732, %v910
      %v912 = vpop.f32.mrb[0].mxu0
      %913 = vmatprep.mubr.f32.mxu0 0.0
      %914 = vmatmul.mubr.f32.gmra.mrb[0].mxu0 %v702
      %v915 = vpop.f32.mrb[0].mxu0
      %v916 = vadd.f32 %v732, %v915
      %v917 = vpop.f32.mrb[0].mxu0
      %918 = vmatprep.mubr.f32.mxu0 0.0
      %919 = vmatmul.mubr.f32.gmra.mrb[0].mxu0 %v703
      %v920 = vpop.f32.mrb[0].mxu0
      %v921 = vadd.f32 %v732, %v920
      %v922 = vpop.f32.mrb[0].mxu0
      %923 = vmatprep.mubr.f32.mxu0 0.0
      %924 = vmatmul.mubr.f32.gmra.mrb[0].mxu0 %v704
      %v925 = vpop.f32.mrb[0].mxu0
      %v926 = vadd.f32 %v732, %v925
      %v927 = vpop.f32.mrb[0].mxu0
      %928 = vmatprep.mubr.f32.mxu0 0.0
      %929 = vmatmul.mubr.f32.gmra.mrb[0].mxu0 %v705
      %v930 = vpop.f32.mrb[0].mxu0
      %v931 = vadd.f32 %v732, %v930
      %v932 = vpop.f32.mrb[0].mxu0
      %933 = vmatprep.mubr.f32.mxu0 0.0
      %934 = vmatmul.mubr.f32.gmra.mrb[0].mxu0 %v706
      %v935 = vpop.f32.mrb[0].mxu0
      %v936 = vadd.f32 %v732, %v935
      %v937 = vpop.f32.mrb[0].mxu0
      %938 = vmatprep.mubr.f32.mxu0 0.0
      %939 = vmatmul.mubr.f32.gmra.mrb[0].mxu0 %v707
      %v940 = vpop.f32.mrb[0].mxu0
      %v941 = vadd.f32 %v732, %v940
      %v942 = vpop.f32.mrb[0].mxu0
      %943 = vmatprep.mubr.f32.mxu0 0.0
      %944 = vmatmul.mubr.f32.gmra.mrb[0].mxu0 %v708
      %v945 = vpop.f32.mrb[0].mxu0
      %v946 = vadd.f32 %v732, %v945
      %v947 = vpop.f32.mrb[0].mxu0
      %948 = vmatprep.mubr.f32.mxu0 0.0
      %949 = vmatmul.mubr.f32.gmra.mrb[0].mxu0 %v709
      %v950 = vpop.f32.mrb[0].mxu0
      %v951 = vadd.f32 %v732, %v950
      %v952 = vpop.f32.mrb[0].mxu0
      %953 = vmatprep.mubr.f32.mxu0 0.0
      %954 = vmatmul.mubr.f32.gmra.mrb[0].mxu0 %v710
      %v955 = vpop.f32.mrb[0].mxu0
      %v956 = vadd.f32 %v732, %v955
      %v957 = vpop.f32.mrb[0].mxu0
      %958 = vdwg.mxu0
      %v959 = vld [vmem:[%s5] sm:$0xff]
      %v960 = vld [vmem:[%s5 + $0x8] sm:$0xff]
      %v961 = vld [vmem:[%s5 + $0x10] sm:$0xff]
      %v962 = vld [vmem:[%s5 + $0x18] sm:$0xff]
      %v963 = vld [vmem:[%s5 + $0x20] sm:$0xff]
      %v964 = vld [vmem:[%s5 + $0x28] sm:$0xff]
      %v965 = vld [vmem:[%s5 + $0x30] sm:$0xff]
      %v966 = vld [vmem:[%s5 + $0x38] sm:$0xff]
      %v967 = vld [vmem:[%s5 + $0x40] sm:$0xff]
      %v968 = vld [vmem:[%s5 + $0x48] sm:$0xff]
      %v969 = vld [vmem:[%s5 + $0x50] sm:$0xff]
      %v970 = vld [vmem:[%s5 + $0x58] sm:$0xff]
      %v971 = vld [vmem:[%s5 + $0x60] sm:$0xff]
      %v972 = vld [vmem:[%s5 + $0x68] sm:$0xff]
      %v973 = vld [vmem:[%s5 + $0x70] sm:$0xff]
      %v974 = vld [vmem:[%s5 + $0x78] sm:$0xff]
      %v975 = vld [vmem:[%s6] sm:$0x1]
      %v977 = vlaneseq
      %v978 = vshrl.u32 %v977, 7
      %v979 = vsub.s32 0, %v978
      %v980 = vrot.slane %v975, %v979
      %982 = vmatprep.subr.mxu0 0.0
      %983 = vmatpush1.msra.mxu0 %v959
      %984 = vmatprep.subr.mxu0 0.0
      %985 = vmatpush1.msra.mxu0 %v960
      %986 = vmatprep.subr.mxu0 0.0
      %987 = vmatpush1.msra.mxu0 %v961
      %988 = vmatprep.subr.mxu0 0.0
      %989 = vmatpush1.msra.mxu0 %v962
      %990 = vmatprep.subr.mxu0 0.0
      %991 = vmatpush1.msra.mxu0 %v963
      %992 = vmatprep.subr.mxu0 0.0
      %993 = vmatpush1.msra.mxu0 %v964
      %994 = vmatprep.subr.mxu0 0.0
      %995 = vmatpush1.msra.mxu0 %v965
      %996 = vmatprep.subr.mxu0 0.0
      %997 = vmatpush1.msra.mxu0 %v966
      %998 = vmatprep.subr.mxu0 0.0
      %999 = vmatpush1.msra.mxu0 %v967
      %1000 = vmatprep.subr.mxu0 0.0
      %1001 = vmatpush1.msra.mxu0 %v968
      %1002 = vmatprep.subr.mxu0 0.0
      %1003 = vmatpush1.msra.mxu0 %v969
      %1004 = vmatprep.subr.mxu0 0.0
      %1005 = vmatpush1.msra.mxu0 %v970
      %1006 = vmatprep.subr.mxu0 0.0
      %1007 = vmatpush1.msra.mxu0 %v971
      %1008 = vmatprep.subr.mxu0 0.0
      %1009 = vmatpush1.msra.mxu0 %v972
      %1010 = vmatprep.subr.mxu0 0.0
      %1011 = vmatpush1.msra.mxu0 %v973
      %1012 = vmatprep.subr.mxu0 0.0
      %1013 = vmatpush1.msra.mxu0 %v974
      %1014 = vmatprep.subr.mxu0 0.0
      %1015 = vmatpush1.msra.mxu0 0.0
      %1016 = vmatprep.subr.mxu0 0.0
      %1017 = vmatpush1.msra.mxu0 0.0
      %1018 = vmatprep.subr.mxu0 0.0
      %1019 = vmatpush1.msra.mxu0 0.0
      %1020 = vmatprep.subr.mxu0 0.0
      %1021 = vmatpush1.msra.mxu0 0.0
      %1022 = vmatprep.subr.mxu0 0.0
      %1023 = vmatpush1.msra.mxu0 0.0
      %1024 = vmatprep.subr.mxu0 0.0
      %1025 = vmatpush1.msra.mxu0 0.0
      %1026 = vmatprep.subr.mxu0 0.0
      %1027 = vmatpush1.msra.mxu0 0.0
      %1028 = vmatprep.subr.mxu0 0.0
      %1029 = vmatpush1.msra.mxu0 0.0
      %1030 = vmatprep.subr.mxu0 0.0
      %1031 = vmatpush1.msra.mxu0 0.0
      %1032 = vmatprep.subr.mxu0 0.0
      %1033 = vmatpush1.msra.mxu0 0.0
      %1034 = vmatprep.subr.mxu0 0.0
      %1035 = vmatpush1.msra.mxu0 0.0
      %1036 = vmatprep.subr.mxu0 0.0
      %1037 = vmatpush1.msra.mxu0 0.0
      %1038 = vmatprep.subr.mxu0 0.0
      %1039 = vmatpush1.msra.mxu0 0.0
      %1040 = vmatprep.subr.mxu0 0.0
      %1041 = vmatpush1.msra.mxu0 0.0
      %1042 = vmatprep.subr.mxu0 0.0
      %1043 = vmatpush1.msra.mxu0 0.0
      %1044 = vmatprep.subr.mxu0 0.0
      %1045 = vmatpush1.msra.mxu0 0.0
      %1046 = vmatprep.mubr.f32.mxu0 0.0
      %1047 = vmatmul.mubr.f32.gmra.mrb[0].mxu0 %v801
      %v1048 = vpop.f32.mrb[0].mxu0
      %v1049 = vadd.f32 %v980, %v1048
      %v1050 = vpop.f32.mrb[0].mxu0
      %1051 = vmatprep.mubr.f32.mxu0 0.0
      %1052 = vmatmul.mubr.f32.gmra.mrb[0].mxu0 %v806
      %v1053 = vpop.f32.mrb[0].mxu0
      %v1054 = vadd.f32 %v980, %v1053
      %v1055 = vpop.f32.mrb[0].mxu0
      %1056 = vmatprep.mubr.f32.mxu0 0.0
      %1057 = vmatmul.mubr.f32.gmra.mrb[0].mxu0 %v811
      %v1058 = vpop.f32.mrb[0].mxu0
      %v1059 = vadd.f32 %v980, %v1058
      %v1060 = vpop.f32.mrb[0].mxu0
      %1061 = vmatprep.mubr.f32.mxu0 0.0
      %1062 = vmatmul.mubr.f32.gmra.mrb[0].mxu0 %v816
      %v1063 = vpop.f32.mrb[0].mxu0
      %v1064 = vadd.f32 %v980, %v1063
      %v1065 = vpop.f32.mrb[0].mxu0
      %1066 = vmatprep.mubr.f32.mxu0 0.0
      %1067 = vmatmul.mubr.f32.gmra.mrb[0].mxu0 %v821
      %v1068 = vpop.f32.mrb[0].mxu0
      %v1069 = vadd.f32 %v980, %v1068
      %v1070 = vpop.f32.mrb[0].mxu0
      %1071 = vmatprep.mubr.f32.mxu0 0.0
      %1072 = vmatmul.mubr.f32.gmra.mrb[0].mxu0 %v826
      %v1073 = vpop.f32.mrb[0].mxu0
      %v1074 = vadd.f32 %v980, %v1073
      %v1075 = vpop.f32.mrb[0].mxu0
      %1076 = vmatprep.mubr.f32.mxu0 0.0
      %1077 = vmatmul.mubr.f32.gmra.mrb[0].mxu0 %v831
      %v1078 = vpop.f32.mrb[0].mxu0
      %v1079 = vadd.f32 %v980, %v1078
      %v1080 = vpop.f32.mrb[0].mxu0
      %1081 = vmatprep.mubr.f32.mxu0 0.0
      %1082 = vmatmul.mubr.f32.gmra.mrb[0].mxu0 %v836
      %v1083 = vpop.f32.mrb[0].mxu0
      %v1084 = vadd.f32 %v980, %v1083
      %v1085 = vpop.f32.mrb[0].mxu0
      %1086 = vmatprep.mubr.f32.mxu0 0.0
      %1087 = vmatmul.mubr.f32.gmra.mrb[0].mxu0 %v841
      %v1088 = vpop.f32.mrb[0].mxu0
      %v1089 = vadd.f32 %v980, %v1088
      %v1090 = vpop.f32.mrb[0].mxu0
      %1091 = vmatprep.mubr.f32.mxu0 0.0
      %1092 = vmatmul.mubr.f32.gmra.mrb[0].mxu0 %v846
      %v1093 = vpop.f32.mrb[0].mxu0
      %v1094 = vadd.f32 %v980, %v1093
      %v1095 = vpop.f32.mrb[0].mxu0
      %1096 = vmatprep.mubr.f32.mxu0 0.0
      %1097 = vmatmul.mubr.f32.gmra.mrb[0].mxu0 %v851
      %v1098 = vpop.f32.mrb[0].mxu0
      %v1099 = vadd.f32 %v980, %v1098
      %v1100 = vpop.f32.mrb[0].mxu0
      %1101 = vmatprep.mubr.f32.mxu0 0.0
      %1102 = vmatmul.mubr.f32.gmra.mrb[0].mxu0 %v856
      %v1103 = vpop.f32.mrb[0].mxu0
      %v1104 = vadd.f32 %v980, %v1103
      %v1105 = vpop.f32.mrb[0].mxu0
      %1106 = vmatprep.mubr.f32.mxu0 0.0
      %1107 = vmatmul.mubr.f32.gmra.mrb[0].mxu0 %v861
      %v1108 = vpop.f32.mrb[0].mxu0
      %v1109 = vadd.f32 %v980, %v1108
      %v1110 = vpop.f32.mrb[0].mxu0
      %1111 = vmatprep.mubr.f32.mxu0 0.0
      %1112 = vmatmul.mubr.f32.gmra.mrb[0].mxu0 %v866
      %v1113 = vpop.f32.mrb[0].mxu0
      %v1114 = vadd.f32 %v980, %v1113
      %v1115 = vpop.f32.mrb[0].mxu0
      %1116 = vmatprep.mubr.f32.mxu0 0.0
      %1117 = vmatmul.mubr.f32.gmra.mrb[0].mxu0 %v871
      %v1118 = vpop.f32.mrb[0].mxu0
      %v1119 = vadd.f32 %v980, %v1118
      %v1120 = vpop.f32.mrb[0].mxu0
      %1121 = vmatprep.mubr.f32.mxu0 0.0
      %1122 = vmatmul.mubr.f32.gmra.mrb[0].mxu0 %v876
      %v1123 = vpop.f32.mrb[0].mxu0
      %v1124 = vadd.f32 %v980, %v1123
      %v1125 = vpop.f32.mrb[0].mxu0
      %1126 = vmatprep.mubr.f32.mxu0 0.0
      %1127 = vmatmul.mubr.f32.gmra.mrb[0].mxu0 %v881
      %v1128 = vpop.f32.mrb[0].mxu0
      %v1129 = vadd.f32 %v980, %v1128
      %v1130 = vpop.f32.mrb[0].mxu0
      %1131 = vmatprep.mubr.f32.mxu0 0.0
      %1132 = vmatmul.mubr.f32.gmra.mrb[0].mxu0 %v886
      %v1133 = vpop.f32.mrb[0].mxu0
      %v1134 = vadd.f32 %v980, %v1133
      %v1135 = vpop.f32.mrb[0].mxu0
      %1136 = vmatprep.mubr.f32.mxu0 0.0
      %1137 = vmatmul.mubr.f32.gmra.mrb[0].mxu0 %v891
      %v1138 = vpop.f32.mrb[0].mxu0
      %v1139 = vadd.f32 %v980, %v1138
      %v1140 = vpop.f32.mrb[0].mxu0
      %1141 = vmatprep.mubr.f32.mxu0 0.0
      %1142 = vmatmul.mubr.f32.gmra.mrb[0].mxu0 %v896
      %v1143 = vpop.f32.mrb[0].mxu0
      %v1144 = vadd.f32 %v980, %v1143
      %v1145 = vpop.f32.mrb[0].mxu0
      %1146 = vmatprep.mubr.f32.mxu0 0.0
      %1147 = vmatmul.mubr.f32.gmra.mrb[0].mxu0 %v901
      %v1148 = vpop.f32.mrb[0].mxu0
      %v1149 = vadd.f32 %v980, %v1148
      %v1150 = vpop.f32.mrb[0].mxu0
      %1151 = vmatprep.mubr.f32.mxu0 0.0
      %1152 = vmatmul.mubr.f32.gmra.mrb[0].mxu0 %v906
      %v1153 = vpop.f32.mrb[0].mxu0
      %v1154 = vadd.f32 %v980, %v1153
      %v1155 = vpop.f32.mrb[0].mxu0
      %1156 = vmatprep.mubr.f32.mxu0 0.0
      %1157 = vmatmul.mubr.f32.gmra.mrb[0].mxu0 %v911
      %v1158 = vpop.f32.mrb[0].mxu0
      %v1159 = vadd.f32 %v980, %v1158
      %v1160 = vpop.f32.mrb[0].mxu0
      %1161 = vmatprep.mubr.f32.mxu0 0.0
      %1162 = vmatmul.mubr.f32.gmra.mrb[0].mxu0 %v916
      %v1163 = vpop.f32.mrb[0].mxu0
      %v1164 = vadd.f32 %v980, %v1163
      %v1165 = vpop.f32.mrb[0].mxu0
      %1166 = vmatprep.mubr.f32.mxu0 0.0
      %1167 = vmatmul.mubr.f32.gmra.mrb[0].mxu0 %v921
      %v1168 = vpop.f32.mrb[0].mxu0
      %v1169 = vadd.f32 %v980, %v1168
      %v1170 = vpop.f32.mrb[0].mxu0
      %1171 = vmatprep.mubr.f32.mxu0 0.0
      %1172 = vmatmul.mubr.f32.gmra.mrb[0].mxu0 %v926
      %v1173 = vpop.f32.mrb[0].mxu0
      %v1174 = vadd.f32 %v980, %v1173
      %v1175 = vpop.f32.mrb[0].mxu0
      %1176 = vmatprep.mubr.f32.mxu0 0.0
      %1177 = vmatmul.mubr.f32.gmra.mrb[0].mxu0 %v931
      %v1178 = vpop.f32.mrb[0].mxu0
      %v1179 = vadd.f32 %v980, %v1178
      %v1180 = vpop.f32.mrb[0].mxu0
      %1181 = vmatprep.mubr.f32.mxu0 0.0
      %1182 = vmatmul.mubr.f32.gmra.mrb[0].mxu0 %v936
      %v1183 = vpop.f32.mrb[0].mxu0
      %v1184 = vadd.f32 %v980, %v1183
      %v1185 = vpop.f32.mrb[0].mxu0
      %1186 = vmatprep.mubr.f32.mxu0 0.0
      %1187 = vmatmul.mubr.f32.gmra.mrb[0].mxu0 %v941
      %v1188 = vpop.f32.mrb[0].mxu0
      %v1189 = vadd.f32 %v980, %v1188
      %v1190 = vpop.f32.mrb[0].mxu0
      %1191 = vmatprep.mubr.f32.mxu0 0.0
      %1192 = vmatmul.mubr.f32.gmra.mrb[0].mxu0 %v946
      %v1193 = vpop.f32.mrb[0].mxu0
      %v1194 = vadd.f32 %v980, %v1193
      %v1195 = vpop.f32.mrb[0].mxu0
      %1196 = vmatprep.mubr.f32.mxu0 0.0
      %1197 = vmatmul.mubr.f32.gmra.mrb[0].mxu0 %v951
      %v1198 = vpop.f32.mrb[0].mxu0
      %v1199 = vadd.f32 %v980, %v1198
      %v1200 = vpop.f32.mrb[0].mxu0
      %1201 = vmatprep.mubr.f32.mxu0 0.0
      %1202 = vmatmul.mubr.f32.gmra.mrb[0].mxu0 %v956
      %v1203 = vpop.f32.mrb[0].mxu0
      %v1204 = vadd.f32 %v980, %v1203
      %v1205 = vpop.f32.mrb[0].mxu0
      %1206 = vdwg.mxu0
      %vm1207 = vcmask 130048
      %1208 = vst.msk [vmem:[%s280] sm:$0xff] %vm1207, %v1049
      %1209 = vst.msk [vmem:[%s280 + $0x8] sm:$0xff] %vm1207, %v1054
      %1210 = vst.msk [vmem:[%s280 + $0x10] sm:$0xff] %vm1207, %v1059
      %1211 = vst.msk [vmem:[%s280 + $0x18] sm:$0xff] %vm1207, %v1064
      %1212 = vst.msk [vmem:[%s280 + $0x20] sm:$0xff] %vm1207, %v1069
      %1213 = vst.msk [vmem:[%s280 + $0x28] sm:$0xff] %vm1207, %v1074
      %1214 = vst.msk [vmem:[%s280 + $0x30] sm:$0xff] %vm1207, %v1079
      %1215 = vst.msk [vmem:[%s280 + $0x38] sm:$0xff] %vm1207, %v1084
      %1216 = vst.msk [vmem:[%s280 + $0x40] sm:$0xff] %vm1207, %v1089
      %1217 = vst.msk [vmem:[%s280 + $0x48] sm:$0xff] %vm1207, %v1094
      %1218 = vst.msk [vmem:[%s280 + $0x50] sm:$0xff] %vm1207, %v1099
      %1219 = vst.msk [vmem:[%s280 + $0x58] sm:$0xff] %vm1207, %v1104
      %1220 = vst.msk [vmem:[%s280 + $0x60] sm:$0xff] %vm1207, %v1109
      %1221 = vst.msk [vmem:[%s280 + $0x68] sm:$0xff] %vm1207, %v1114
      %1222 = vst.msk [vmem:[%s280 + $0x70] sm:$0xff] %vm1207, %v1119
      %1223 = vst.msk [vmem:[%s280 + $0x78] sm:$0xff] %vm1207, %v1124
      %1224 = vst.msk [vmem:[%s280 + $0x80] sm:$0xff] %vm1207, %v1129
      %1225 = vst.msk [vmem:[%s280 + $0x88] sm:$0xff] %vm1207, %v1134
      %1226 = vst.msk [vmem:[%s280 + $0x90] sm:$0xff] %vm1207, %v1139
      %1227 = vst.msk [vmem:[%s280 + $0x98] sm:$0xff] %vm1207, %v1144
      %1228 = vst.msk [vmem:[%s280 + $0xa0] sm:$0xff] %vm1207, %v1149
      %1229 = vst.msk [vmem:[%s280 + $0xa8] sm:$0xff] %vm1207, %v1154
      %1230 = vst.msk [vmem:[%s280 + $0xb0] sm:$0xff] %vm1207, %v1159
      %1231 = vst.msk [vmem:[%s280 + $0xb8] sm:$0xff] %vm1207, %v1164
      %1232 = vst.msk [vmem:[%s280 + $0xc0] sm:$0xff] %vm1207, %v1169
      %1233 = vst.msk [vmem:[%s280 + $0xc8] sm:$0xff] %vm1207, %v1174
      %1234 = vst.msk [vmem:[%s280 + $0xd0] sm:$0xff] %vm1207, %v1179
      %1235 = vst.msk [vmem:[%s280 + $0xd8] sm:$0xff] %vm1207, %v1184
      %1236 = vst.msk [vmem:[%s280 + $0xe0] sm:$0xff] %vm1207, %v1189
      %1237 = vst.msk [vmem:[%s280 + $0xe8] sm:$0xff] %vm1207, %v1194
      %1238 = vst.msk [vmem:[%s280 + $0xf0] sm:$0xff] %vm1207, %v1199
      %1239 = vst.msk [vmem:[%s280 + $0xf8] sm:$0xff] %vm1207, %v1204
      %s1240 = smul.u32 32, %s18
      %p1241 = scmp.lt.s32.totalorder %s1240, 63
      %s1242 = scalar_select %p1241, %s1240, 63
      %s1243 = smul.addr %s1242, 8
      %s1244 = scalar_lea.vmem %s7, %s1243
      // Predicated region
      $region49: #{tpu_custom_call.1} parent=47 // pred_check
        %p1245 = pneg %p188
      $region50: #{tpu_custom_call.1} parent=47 // pred_check_branch
        %1247 = sbr.rel (%p1245) target = $region52
      $region51: #{tpu_custom_call.1} parent=47 // pred_region
        %s1248 = smul.u32 32, %s18
      $region52: #{tpu_custom_call.1} parent=47 // pred_fallthru
        _
    $region48: #{tpu_custom_call.1} parent=5 // pred_fallthru
      _
    %p1249 = scmp.le.s32.totalorder 2, %s13
    // Predicated region
    $region53: #{tpu_custom_call.1} parent=5 // pred_check
      %p1250 = pneg %p1249
    $region54: #{tpu_custom_call.1} parent=5 // pred_check_branch
      %1252 = sbr.rel (%p1250) target = $region56
    $region55: #{tpu_custom_call.1} parent=5 // pred_region
      %s1253 = ssub.s32 %s13, 2
      // Predicated region
      $region57: #{tpu_custom_call.1} parent=55 // pred_check
        %p1254 = pneg %p194
      $region58: #{tpu_custom_call.1} parent=55 // pred_check_branch
        %1256 = sbr.rel (%p1254) target = $region60
      $region59: #{tpu_custom_call.1} parent=55 // pred_region
        %s1257 = smul.u32 32, %s19
        %p1258 = scmp.lt.s32.totalorder %s1257, 63
        %s1259 = scalar_select %p1258, %s1257, 63
        %s1260 = smul.addr %s1259, 8
        %s1261 = scalar_lea.vmem %s7, %s1260
      $region60: #{tpu_custom_call.1} parent=55 // pred_fallthru
        _
    $region56: #{tpu_custom_call.1} parent=5 // pred_fallthru
      _
  $region6: #{tpu_custom_call.1} parent=0 // loop_footer
    %s17 = sadd.s32 1, %s13
  $region7: #{tpu_custom_call.1} parent=0 // loop_footer_branch
    %12 = sbr.rel target = $region3
  $region8: #{tpu_custom_call.1} parent=0 // loop_exit
    _

</llo_original>
